<compile_context>
chip_gen: v6e
topology: v6e:2x2x1
jax: 0.10.0
libtpu: 0.0.40
codegen_flags: <defaults>
</compile_context>

<pallas_src>
import math

import jax
import jax.numpy as jnp
import numpy as np
from jax.experimental import pallas as pl
from jax.experimental.pallas import tpu as pltpu

BN_EPS = 1e-5


def _round_up(a, b):
    return ((a + b - 1) // b) * b


# --------------------------------------------------------------------------
# Kernel 1: BatchNorm statistics (sum / sum-of-squares over the T*N rows),
# accumulated across a sequential grid over large blocks of timesteps.
# --------------------------------------------------------------------------
def _bn_stats_kernel(x_ref, sum_ref, sumsq_ref):
    @pl.when(pl.program_id(0) == 0)
    def _():
        sum_ref[...] = jnp.zeros_like(sum_ref)
        sumsq_ref[...] = jnp.zeros_like(sumsq_ref)

    tb, n, f = x_ref.shape
    x = x_ref[...].astype(jnp.float32).reshape(tb * n, f)      # (TB*N, F)
    sum_ref[...] += jnp.sum(x, axis=0, keepdims=True)          # (1, F)
    sumsq_ref[...] += jnp.sum(x * x, axis=0, keepdims=True)


# --------------------------------------------------------------------------
# Kernel 2: blocked LSTM.  Grid = (batch_chunks, T_pad // TB).  The batch
# axis is "parallel" (megacore-shardable); the time axis is sequential with
# h/c carried in VMEM scratch.  BatchNorm is already folded into wih/bias.
# --------------------------------------------------------------------------
def _lstm_kernel(chunk_max_ref,                       # scalar prefetch (SMEM)
                 x_ref, wih_ref, whh_ref, bias_ref, len_ref,
                 o_ref,
                 h_scr, c_scr, gx_scr):
    b_chunk = pl.program_id(0)
    t_blk = pl.program_id(1)
    tb, nb, f = x_ref.shape
    h_dim = h_scr.shape[-1]

    @pl.when(t_blk == 0)
    def _():
        h_scr[...] = jnp.zeros_like(h_scr)
        c_scr[...] = jnp.zeros_like(c_scr)

    t0 = t_blk * tb
    # Skip blocks entirely past the longest sequence of this batch chunk.
    block_live = t0 < chunk_max_ref[b_chunk]

    @pl.when(jnp.logical_not(block_live))
    def _():
        o_ref[...] = jnp.zeros_like(o_ref)

    @pl.when(block_live)
    def _():
        # Hoisted input projection: one (TB*NB, F) x (F, 4H) MXU matmul for
        # the whole timestep block; bias (incl. BN shift term) folded in.
        xb = x_ref[...].reshape(tb * nb, f)
        gx = jnp.dot(xb, wih_ref[...], preferred_element_type=jnp.float32)
        gx_scr[...] = gx + bias_ref[...]                 # (TB*NB, 4H) f32

        whh = whh_ref[...]

        # Validity mask (pad_packed_sequence semantics), built once per block
        # and applied per step before the store (no output read-modify-write).
        t_ids = t0 + jax.lax.broadcasted_iota(jnp.int32, (tb, nb, 1), 0)
        mask = (t_ids < len_ref[...][None, :, :]).astype(jnp.float32)

        def step(t, carry):
            h_in = h_scr[...]
            if h_in.dtype != whh.dtype:                 # bf16 MXU operands
                h_in = h_in.astype(whh.dtype)
            row0 = pl.multiple_of(t * nb, nb)
            gates = gx_scr[pl.ds(row0, nb), :] + jnp.dot(
                h_in, whh, preferred_element_type=jnp.float32)
            # PyTorch LSTM gate order: i, f, g, o.  One sigmoid over the
            # contiguous i|f slice (fewer EUP pushes).
            if_g = jax.nn.sigmoid(gates[:, : 2 * h_dim])
            i_g = if_g[:, :h_dim]
            f_g = if_g[:, h_dim:]
            g_g = jnp.tanh(gates[:, 2 * h_dim:3 * h_dim])
            o_g = jax.nn.sigmoid(gates[:, 3 * h_dim:])
            c = f_g * c_scr[...] + i_g * g_g
            h = o_g * jnp.tanh(c)
            c_scr[...] = c
            h_scr[...] = h
            o_ref[t] = (h * mask[t]).astype(o_ref.dtype)
            return carry

        jax.lax.fori_loop(0, tb, step, 0, unroll=True if tb <= 32 else 8)


# --------------------------------------------------------------------------
# Wrapper
# --------------------------------------------------------------------------
def batch_rnn_forward(x, lengths, params, *, tb=None, nb=None,
                      use_bf16_matmul=True,
                      vmem_budget_bytes=40 * 1024 * 1024):
    """Forward pass of BatchRNN (BatchNorm over (T*N,F) + unidirectional LSTM).

    nb: batch rows per chunk.  Keep nb=N on v5e/v6e (single TensorCore);
        use nb=N//2 (>=64 and a multiple of 8) on v7x to shard the batch
        across its two TensorCores.
    """
    T, N, F = x.shape
    H = params["w_hh_t"].shape[0]
    nb = N if nb is None else nb
    assert N % nb == 0 and (nb == N or nb % 8 == 0)
    mm_dtype = jnp.bfloat16 if use_bf16_matmul else jnp.float32
    in_bytes = 2 if use_bf16_matmul else 4

    # ---- Auto-size the timestep block: largest TB keeping weights (single-
    # buffered), gx_scr, and double-buffered x/out blocks within budget. ----
    if tb is None:
        t_cap = max(8, _round_up(T, 8))
        w_bytes = (F + H) * 4 * H * in_bytes + 4 * H * 4        # Wih, Whh, bias
        fixed = w_bytes + 2 * nb * H * 4                        # h, c scratch
        tb = 8
        for cand in (8, 16, 24, 32, 48, 64, 96, 128):
            c = min(cand, t_cap)
            per_blk = (c * nb * 4 * H * 4                       # gx_scr (f32)
                       + 2 * c * nb * F * in_bytes              # x double-buf
                       + 2 * c * nb * H * 4)                    # out double-buf
            if fixed + per_blk <= vmem_budget_bytes:
                tb = c
            if c == t_cap:
                break
    est = (fixed if tb is not None else 0)
    est = ((F + H) * 4 * H * in_bytes + 4 * H * 4 + 2 * nb * H * 4
           + tb * nb * 4 * H * 4 + 2 * tb * nb * F * in_bytes
           + 2 * tb * nb * H * 4)
    vmem_limit = int(min(64 * 1024 * 1024, max(32 * 1024 * 1024, est * 3 // 2)))

    # ---- BatchNorm statistics (training-mode) over the (T*N, F) view,
    # with ~4 MiB HBM-roofline-sized time blocks. ----
    row_bytes = N * F * 4
    tgt_rows = max(8, ((4 * 1024 * 1024) // row_bytes) // 8 * 8)
    tb_stats = min(_round_up(T, 8), tgt_rows)
    t_pad_s = _round_up(T, tb_stats)
    x_stats = x if t_pad_s == T else jnp.pad(
        x, ((0, t_pad_s - T), (0, 0), (0, 0)))

    sums, sumsqs = pl.pallas_call(
        _bn_stats_kernel,
        out_shape=(jax.ShapeDtypeStruct((1, F), jnp.float32),
                   jax.ShapeDtypeStruct((1, F), jnp.float32)),
        grid_spec=pltpu.PrefetchScalarGridSpec(
            num_scalar_prefetch=0,
            grid=(t_pad_s // tb_stats,),
            in_specs=[pl.BlockSpec((tb_stats, N, F), lambda t: (t, 0, 0))],
            out_specs=[pl.BlockSpec((1, F), lambda t: (0, 0)),
                       pl.BlockSpec((1, F), lambda t: (0, 0))]),
        compiler_params=pltpu.CompilerParams(
            dimension_semantics=("arbitrary",)),
    )(x_stats)

    count = jnp.float32(T * N)
    mean = sums / count                                     # (1, F)
    var = jnp.maximum(sumsqs / count - mean * mean, 0.0)    # biased variance
    inv_std = jax.lax.rsqrt(var + BN_EPS)
    scale = params["bn_gamma"][None, :] * inv_std           # (1, F)
    shift = params["bn_beta"][None, :] - mean * scale       # (1, F)

    # Fold BN into the input projection (done once in XLA, not per step):
    #   (x*scale + shift) @ Wih + b  ==  x @ (scale[:,None]*Wih) + (shift@Wih + b)
    wih_folded = (scale.reshape(F, 1) * params["w_ih_t"]).astype(mm_dtype)
    whh = params["w_hh_t"].astype(mm_dtype)
    bias_folded = ((params["b_ih"] + params["b_hh"])[None, :]
                   + shift @ params["w_ih_t"]).astype(jnp.float32)  # (1, 4H)

    # ---- LSTM over the padded sequence ----
    t_pad = _round_up(T, tb)
    x_lstm = x if t_pad == T else jnp.pad(x, ((0, t_pad - T), (0, 0), (0, 0)))
    x_lstm = x_lstm.astype(mm_dtype)

    lengths_i32 = lengths.astype(jnp.int32)
    lengths2d = lengths_i32.reshape(N, 1)
    # Per-batch-chunk max length (SMEM scalar prefetch) for skipping blocks.
    chunk_max = jnp.max(lengths_i32.reshape(N // nb, nb), axis=1)

    out = pl.pallas_call(
        _lstm_kernel,
        out_shape=jax.ShapeDtypeStruct((t_pad, N, H), jnp.float32),
        grid_spec=pltpu.PrefetchScalarGridSpec(
            num_scalar_prefetch=1,
            grid=(N // nb, t_pad // tb),
            in_specs=[
                pl.BlockSpec((tb, nb, F), lambda b, t, cm: (t, b, 0)),
                pl.BlockSpec((F, 4 * H), lambda b, t, cm: (0, 0),
                             pipeline_mode=pl.Buffered(1)),
                pl.BlockSpec((H, 4 * H), lambda b, t, cm: (0, 0),
                             pipeline_mode=pl.Buffered(1)),
                pl.BlockSpec((1, 4 * H), lambda b, t, cm: (0, 0),
                             pipeline_mode=pl.Buffered(1)),
                pl.BlockSpec((nb, 1), lambda b, t, cm: (b, 0)),
            ],
            out_specs=pl.BlockSpec((tb, nb, H), lambda b, t, cm: (t, b, 0)),
            scratch_shapes=[pltpu.VMEM((nb, H), jnp.float32),
                            pltpu.VMEM((nb, H), jnp.float32),
                            pltpu.VMEM((tb * nb, 4 * H), jnp.float32)]),
        compiler_params=pltpu.CompilerParams(
            dimension_semantics=("parallel", "arbitrary"),
            vmem_limit_bytes=vmem_limit),
    )(chunk_max, x_lstm, wih_folded, whh, bias_folded, lengths2d)

    return out[:T] if t_pad != T else out


# --------------------------------------------------------------------------
# Pure-JAX reference (mirrors the PyTorch forward) for a correctness check.
# --------------------------------------------------------------------------
def reference_forward(x, lengths, params):
    T, N, F = x.shape
    H = params["w_hh_t"].shape[0]

    xf = x.reshape(T * N, F).astype(jnp.float32)
    mean = jnp.mean(xf, axis=0)
    var = jnp.mean((xf - mean) ** 2, axis=0)
    xn = (xf - mean) / jnp.sqrt(var + BN_EPS) * params["bn_gamma"] + params["bn_beta"]
    xn = xn.reshape(T, N, F)

    w_ih_t, w_hh_t = params["w_ih_t"], params["w_hh_t"]
    bias = params["b_ih"] + params["b_hh"]

    def step(carry, x_t):
        h, c = carry
        gates = x_t @ w_ih_t + h @ w_hh_t + bias
        i, f, g, o = jnp.split(gates, 4, axis=-1)
        i, f, o = jax.nn.sigmoid(i), jax.nn.sigmoid(f), jax.nn.sigmoid(o)
        g = jnp.tanh(g)
        c = f * c + i * g
        h = o * jnp.tanh(c)
        return (h, c), h

    h0 = jnp.zeros((N, H), jnp.float32)
    _, hs = jax.lax.scan(step, (h0, h0), xn)
    mask = (jnp.arange(T)[:, None] < lengths[None, :]).astype(jnp.float32)[:, :, None]
    return hs * mask


if __name__ == "__main__":
    # seq_len, batch, input_size, hidden_size (small but lane-friendly: 4H=512)
    T, N, F, H = 20, 8, 64, 128

    key = jax.random.PRNGKey(0)
    ks = jax.random.split(key, 8)

    stdv = 1.0 / math.sqrt(H)
    params = {
        # stored pre-transposed: (F, 4H) and (H, 4H)
        "w_ih_t": jax.random.uniform(ks[0], (F, 4 * H), jnp.float32, -stdv, stdv),
        "w_hh_t": jax.random.uniform(ks[1], (H, 4 * H), jnp.float32, -stdv, stdv),
        "b_ih": jax.random.uniform(ks[2], (4 * H,), jnp.float32, -stdv, stdv),
        "b_hh": jax.random.uniform(ks[3], (4 * H,), jnp.float32, -stdv, stdv),
        "bn_gamma": 1.0 + 0.1 * jax.random.normal(ks[4], (F,), jnp.float32),
        "bn_beta": 0.1 * jax.random.normal(ks[5], (F,), jnp.float32),
    }

    x = jax.random.normal(ks[6], (T, N, F), jnp.float32)
    # pack_padded_sequence default expects lengths sorted in decreasing order
    lengths = jnp.array([20, 20, 18, 16, 13, 10, 7, 5], dtype=jnp.int32)

    ref = jax.block_until_ready(reference_forward(x, lengths, params))

    # Exact-precision path: f32 matmuls, bit-level match to the f32 module.
    out_f32 = jax.block_until_ready(
        batch_rnn_forward(x, lengths, params, use_bf16_matmul=False))
    np.testing.assert_allclose(np.asarray(out_f32), np.asarray(ref),
                               rtol=2e-3, atol=2e-3)

    # Fast path: bf16 MXU operands, f32 accumulation / gate math / cell state.
    out_bf16 = jax.block_until_ready(
        batch_rnn_forward(x, lengths, params, use_bf16_matmul=True))
    np.testing.assert_allclose(np.asarray(out_bf16), np.asarray(ref),
                               rtol=2e-2, atol=2e-2)

    print("KERNEL_OK")
</pallas_src>

<mosaic_0001>
module attributes {stable_mosaic.version = 11 : i64} {
  func.func @_bn_stats_kernel(%arg0: i32, %arg1: memref<24x8x64xf32, #tpu.memory_space<vmem>>, %arg2: memref<1x64xf32, #tpu.memory_space<vmem>>, %arg3: memref<1x64xf32, #tpu.memory_space<vmem>>) attributes {dimension_semantics = [#tpu.dimension_semantics<arbitrary>], iteration_bounds = array<i64: 1>, scalar_prefetch = 0 : i64, scratch_operands = 0 : i64, tpu.core_type = #tpu.core_type<tc>, window_params = [{transform_indices = @transform_0, window_bounds = array<i64: 24, 8, 64>}, {pipeline_mode = #tpu.pipeline_mode<synchronous>, transform_indices = @transform_1, window_bounds = array<i64: 1, 64>}, {pipeline_mode = #tpu.pipeline_mode<synchronous>, transform_indices = @transform_2, window_bounds = array<i64: 1, 64>}]} {
    %c0_i32 = arith.constant 0 : i32
    %0 = arith.cmpi eq, %arg0, %c0_i32 : i32
    %1 = arith.extui %0 : i1 to i32
    %c0_i32_0 = arith.constant 0 : i32
    %2 = arith.cmpi ne, %1, %c0_i32_0 : i32
    scf.if %2 {
      %cst_12 = arith.constant 0.000000e+00 : f32
      %16 = vector.broadcast %cst_12 : f32 to vector<1x64xf32>
      %c0_13 = arith.constant 0 : index
      %c0_14 = arith.constant 0 : index
      %17 = vector.load %arg2[%c0_13, %c0_14] : memref<1x64xf32, #tpu.memory_space<vmem>>, vector<1x64xf32>
      tpu.vector_store %arg2[%c0_13, %c0_14], %16 {strides = array<i32>} : memref<1x64xf32, #tpu.memory_space<vmem>>, vector<1x64xf32>,
      %cst_15 = arith.constant 0.000000e+00 : f32
      %18 = vector.broadcast %cst_15 : f32 to vector<1x64xf32>
      %c0_16 = arith.constant 0 : index
      %c0_17 = arith.constant 0 : index
      %19 = vector.load %arg3[%c0_16, %c0_17] : memref<1x64xf32, #tpu.memory_space<vmem>>, vector<1x64xf32>
      tpu.vector_store %arg3[%c0_16, %c0_17], %18 {strides = array<i32>} : memref<1x64xf32, #tpu.memory_space<vmem>>, vector<1x64xf32>,
    } else {
    }
    %c0 = arith.constant 0 : index
    %c0_1 = arith.constant 0 : index
    %c0_2 = arith.constant 0 : index
    %3 = vector.load %arg1[%c0, %c0_1, %c0_2] : memref<24x8x64xf32, #tpu.memory_space<vmem>>, vector<24x8x64xf32>
    %4 = vector.shape_cast %3 : vector<24x8x64xf32> to vector<192x64xf32>
    %c0_3 = arith.constant 0 : index
    %c0_4 = arith.constant 0 : index
    %5 = vector.load %arg2[%c0_3, %c0_4] : memref<1x64xf32, #tpu.memory_space<vmem>>, vector<1x64xf32>
    %cst = arith.constant dense<0.000000e+00> : vector<64xf32>
    %6 = vector.multi_reduction <add>, %4, %cst [0] : vector<192x64xf32> to vector<64xf32>
    %7 = vector.shape_cast %6 : vector<64xf32> to vector<1x64xf32>
    %8 = arith.addf %5, %7 : vector<1x64xf32>
    %c0_5 = arith.constant 0 : index
    %c0_6 = arith.constant 0 : index
    %9 = vector.load %arg2[%c0_5, %c0_6] : memref<1x64xf32, #tpu.memory_space<vmem>>, vector<1x64xf32>
    tpu.vector_store %arg2[%c0_5, %c0_6], %8 {strides = array<i32>} : memref<1x64xf32, #tpu.memory_space<vmem>>, vector<1x64xf32>,
    %c0_7 = arith.constant 0 : index
    %c0_8 = arith.constant 0 : index
    %10 = vector.load %arg3[%c0_7, %c0_8] : memref<1x64xf32, #tpu.memory_space<vmem>>, vector<1x64xf32>
    %11 = arith.mulf %4, %4 : vector<192x64xf32>
    %cst_9 = arith.constant dense<0.000000e+00> : vector<64xf32>
    %12 = vector.multi_reduction <add>, %11, %cst_9 [0] : vector<192x64xf32> to vector<64xf32>
    %13 = vector.shape_cast %12 : vector<64xf32> to vector<1x64xf32>
    %14 = arith.addf %10, %13 : vector<1x64xf32>
    %c0_10 = arith.constant 0 : index
    %c0_11 = arith.constant 0 : index
    %15 = vector.load %arg3[%c0_10, %c0_11] : memref<1x64xf32, #tpu.memory_space<vmem>>, vector<1x64xf32>
    tpu.vector_store %arg3[%c0_10, %c0_11], %14 {strides = array<i32>} : memref<1x64xf32, #tpu.memory_space<vmem>>, vector<1x64xf32>,
    return
  }
  func.func @transform_0(%arg0: i32) -> (i32, i32, i32) {
    %c0_i32 = arith.constant 0 : i32
    %c0_i32_0 = arith.constant 0 : i32
    %c0_i32_1 = arith.constant 0 : i32
    return %arg0, %c0_i32, %c0_i32_0 : i32, i32, i32
  }
  func.func @transform_1(%arg0: i32) -> (i32, i32) {
    %c0_i32 = arith.constant 0 : i32
    %c0_i32_0 = arith.constant 0 : i32
    %c0_i32_1 = arith.constant 0 : i32
    return %c0_i32, %c0_i32_0 : i32, i32
  }
  func.func @transform_2(%arg0: i32) -> (i32, i32) {
    %c0_i32 = arith.constant 0 : i32
    %c0_i32_0 = arith.constant 0 : i32
    %c0_i32_1 = arith.constant 0 : i32
    return %c0_i32, %c0_i32_0 : i32, i32
  }
}

</mosaic_0001>

<llo_original>
// kernel: tpu_custom_call.1
$region0: #{tpu_custom_call.1}
  #allocation0 [shape = 'u32[]', space=smem, size = 0x4, offset = 0x4, fixed_abs, tag = 'smem constant byte address 0x4 - core index']
  #allocation1 [shape = 'u32[144,128]{1,0:T(1,128)}', space=vmem, size = 0x12000, scoped, tag = 'internal scratch']
  %s0 = inlined_call_operand.hbm [shape: f32[24,8,64], index: 0, kind: input, shape index: {}]
  %s1 = inlined_call_operand.hbm [shape: f32[1,64], index: 1, kind: output, shape index: {0}]
  %s2 = inlined_call_operand.hbm [shape: f32[1,64], index: 2, kind: output, shape index: {1}]
  %3 = xla_tuple %s1, %s2
  %s4 = sld [smem:[#allocation0]]
  $region30: #{tpu_custom_call.1} parent=0
    _
  %s6 = ssub.s32 1, %s4
  %s7 = scalar_select 0, %s6, %s4
  $region1: #{tpu_custom_call.1} parent=0
    #allocation2 [shape = 'u8[98304]{0}', space=vmem, size = 0x18000, scoped, tag = 'input window, operand 0, single buffered']
    #allocation3 [shape = 's32[1]{0}', space=sflag, size = 0x4, scoped, tag = 'scoped memory for tpu_custom_call.1']
    #allocation4 [shape = 's32[1]{0}', space=sflag, size = 0x4, scoped, tag = 'scoped memory for tpu_custom_call.1']
    #allocation5 [shape = 'u8[512]{0}', space=vmem, size = 0x400, scoped, tag = 'output window, operand 0, single buffered']
    #allocation6 [shape = 'u8[512]{0}', space=vmem, size = 0x400, scoped, tag = 'output window, operand 1, single buffered']
    #allocation7 [shape = 's32[1]{0}', space=sflag, size = 0x4, scoped, tag = 'scoped memory for tpu_custom_call.1']
    %8 = vsyncpa [#allocation3], 0
    %9 = vsyncpa [#allocation4], 0
    %10 = vsyncpa [#allocation7], 0
    // Predicated region
    $region2: #{tpu_custom_call.1} parent=1 // pred_check
      _
    $region3: #{tpu_custom_call.1} parent=1 // pred_check_branch
      %12 = sbr.rel (0) target = $region5
    $region4: #{tpu_custom_call.1} parent=1 // pred_region
      %s14 = ssub.s32 3072, 3072
      %15 = vsyncadd [#allocation3], %s14
      %s16 = sshll.u32 [#allocation2], 4
      %s17 = int_to_ptr.vmem [resolvable:$true] %s16
      %22 = dma.hbm_to_vmem [thread:$0]  %s0, 3072, %s17, [#allocation3], 128, 128, 8
    $region5: #{tpu_custom_call.1} parent=1 // pred_fallthru
      _
    // Predicated region
    $region6: #{tpu_custom_call.1} parent=1 // pred_check
      _
    $region7: #{tpu_custom_call.1} parent=1 // pred_check_branch
      %24 = sbr.rel (0) target = $region9
    $region8: #{tpu_custom_call.1} parent=1 // pred_region
      %25 = dma.done [#allocation3], 3072
    $region9: #{tpu_custom_call.1} parent=1 // pred_fallthru
      _
    %p26 = scmp.eq.s32.totalorder 0, 0
    // Predicated region
    $region10: #{tpu_custom_call.1} parent=1 // pred_check
      %p27 = pneg %p26
    $region11: #{tpu_custom_call.1} parent=1 // pred_check_branch
      %29 = sbr.rel (%p27) target = $region13
    $region12: #{tpu_custom_call.1} parent=1 // pred_region
      %vm30 = vcmask 516096
      %31 = vst.msk [vmem:[#allocation5] sm:$0x1] %vm30, 0.0
      %32 = vst.msk [vmem:[#allocation6] sm:$0x1] %vm30, 0.0
    $region13: #{tpu_custom_call.1} parent=1 // pred_fallthru
      _
    %v33 = vld [vmem:[#allocation2] sm:$0xff]
    %v34 = vld [vmem:[#allocation2 + $0x8] sm:$0xff]
    %v35 = vld [vmem:[#allocation2 + $0x10] sm:$0xff]
    %v36 = vld [vmem:[#allocation2 + $0x18] sm:$0xff]
    %v37 = vld [vmem:[#allocation2 + $0x20] sm:$0xff]
    %v38 = vld [vmem:[#allocation2 + $0x28] sm:$0xff]
    %v39 = vld [vmem:[#allocation2 + $0x30] sm:$0xff]
    %v40 = vld [vmem:[#allocation2 + $0x38] sm:$0xff]
    %v41 = vld [vmem:[#allocation2 + $0x40] sm:$0xff]
    %v42 = vld [vmem:[#allocation2 + $0x48] sm:$0xff]
    %v43 = vld [vmem:[#allocation2 + $0x50] sm:$0xff]
    %v44 = vld [vmem:[#allocation2 + $0x58] sm:$0xff]
    %v45 = vld [vmem:[#allocation2 + $0x60] sm:$0xff]
    %v46 = vld [vmem:[#allocation2 + $0x68] sm:$0xff]
    %v47 = vld [vmem:[#allocation2 + $0x70] sm:$0xff]
    %v48 = vld [vmem:[#allocation2 + $0x78] sm:$0xff]
    %v49 = vld [vmem:[#allocation2 + $0x80] sm:$0xff]
    %v50 = vld [vmem:[#allocation2 + $0x88] sm:$0xff]
    %v51 = vld [vmem:[#allocation2 + $0x90] sm:$0xff]
    %v52 = vld [vmem:[#allocation2 + $0x98] sm:$0xff]
    %v53 = vld [vmem:[#allocation2 + $0xa0] sm:$0xff]
    %v54 = vld [vmem:[#allocation2 + $0xa8] sm:$0xff]
    %v55 = vld [vmem:[#allocation2 + $0xb0] sm:$0xff]
    %v56 = vld [vmem:[#allocation2 + $0xb8] sm:$0xff]
    %v57 = vld [vmem:[#allocation5] sm:$0x1]
    %vm58 = vcmask 523264
    %v59 = vsel %vm58, %v33, 0.0
    %v60 = vsel %vm58, %v34, 0.0
    %v61 = vadd.f32 %v59, %v60
    %v62 = vsel %vm58, %v35, 0.0
    %v63 = vadd.f32 %v61, %v62
    %v64 = vsel %vm58, %v36, 0.0
    %v65 = vadd.f32 %v63, %v64
    %v66 = vsel %vm58, %v37, 0.0
    %v67 = vadd.f32 %v65, %v66
    %v68 = vsel %vm58, %v38, 0.0
    %v69 = vadd.f32 %v67, %v68
    %v70 = vsel %vm58, %v39, 0.0
    %v71 = vadd.f32 %v69, %v70
    %v72 = vsel %vm58, %v40, 0.0
    %v73 = vadd.f32 %v71, %v72
    %v74 = vsel %vm58, %v41, 0.0
    %v75 = vadd.f32 %v73, %v74
    %v76 = vsel %vm58, %v42, 0.0
    %v77 = vadd.f32 %v75, %v76
    %v78 = vsel %vm58, %v43, 0.0
    %v79 = vadd.f32 %v77, %v78
    %v80 = vsel %vm58, %v44, 0.0
    %v81 = vadd.f32 %v79, %v80
    %v82 = vsel %vm58, %v45, 0.0
    %v83 = vadd.f32 %v81, %v82
    %v84 = vsel %vm58, %v46, 0.0
    %v85 = vadd.f32 %v83, %v84
    %v86 = vsel %vm58, %v47, 0.0
    %v87 = vadd.f32 %v85, %v86
    %v88 = vsel %vm58, %v48, 0.0
    %v89 = vadd.f32 %v87, %v88
    %v90 = vsel %vm58, %v49, 0.0
    %v91 = vadd.f32 %v89, %v90
    %v92 = vsel %vm58, %v50, 0.0
    %v93 = vadd.f32 %v91, %v92
    %v94 = vsel %vm58, %v51, 0.0
    %v95 = vadd.f32 %v93, %v94
    %v96 = vsel %vm58, %v52, 0.0
    %v97 = vadd.f32 %v95, %v96
    %v98 = vsel %vm58, %v53, 0.0
    %v99 = vadd.f32 %v97, %v98
    %v100 = vsel %vm58, %v54, 0.0
    %v101 = vadd.f32 %v99, %v100
    %v102 = vsel %vm58, %v55, 0.0
    %v103 = vadd.f32 %v101, %v102
    %v104 = vsel %vm58, %v56, 0.0
    %v105 = vadd.f32 %v103, %v104
    %v106 = vrot.slane %v105, 4
    %v107 = vadd.f32 %v105, %v106
    %v108 = vrot.slane %v107, 2
    %v109 = vadd.f32 %v107, %v108
    %v110 = vrot.slane %v109, 1
    %v111 = vadd.f32 %v109, %v110
    %v112 = vadd.f32 %v57, %v111
    %vm113 = vcmask 516096
    %114 = vst.msk [vmem:[#allocation5] sm:$0x1] %vm113, %v112
    %v115 = vld [vmem:[#allocation6] sm:$0x1]
    %v116 = vmul.f32 %v33, %v33
    %v117 = vmul.f32 %v34, %v34
    %v118 = vmul.f32 %v35, %v35
    %v119 = vmul.f32 %v36, %v36
    %v120 = vmul.f32 %v37, %v37
    %v121 = vmul.f32 %v38, %v38
    %v122 = vmul.f32 %v39, %v39
    %v123 = vmul.f32 %v40, %v40
    %v124 = vmul.f32 %v41, %v41
    %v125 = vmul.f32 %v42, %v42
    %v126 = vmul.f32 %v43, %v43
    %v127 = vmul.f32 %v44, %v44
    %v128 = vmul.f32 %v45, %v45
    %v129 = vmul.f32 %v46, %v46
    %v130 = vmul.f32 %v47, %v47
    %v131 = vmul.f32 %v48, %v48
    %v132 = vmul.f32 %v49, %v49
    %v133 = vmul.f32 %v50, %v50
    %v134 = vmul.f32 %v51, %v51
    %v135 = vmul.f32 %v52, %v52
    %v136 = vmul.f32 %v53, %v53
    %v137 = vmul.f32 %v54, %v54
    %v138 = vmul.f32 %v55, %v55
    %v139 = vmul.f32 %v56, %v56
    %v140 = vsel %vm58, %v116, 0.0
    %v141 = vsel %vm58, %v117, 0.0
    %v142 = vadd.f32 %v140, %v141
    %v143 = vsel %vm58, %v118, 0.0
    %v144 = vadd.f32 %v142, %v143
    %v145 = vsel %vm58, %v119, 0.0
    %v146 = vadd.f32 %v144, %v145
    %v147 = vsel %vm58, %v120, 0.0
    %v148 = vadd.f32 %v146, %v147
    %v149 = vsel %vm58, %v121, 0.0
    %v150 = vadd.f32 %v148, %v149
    %v151 = vsel %vm58, %v122, 0.0
    %v152 = vadd.f32 %v150, %v151
    %v153 = vsel %vm58, %v123, 0.0
    %v154 = vadd.f32 %v152, %v153
    %v155 = vsel %vm58, %v124, 0.0
    %v156 = vadd.f32 %v154, %v155
    %v157 = vsel %vm58, %v125, 0.0
    %v158 = vadd.f32 %v156, %v157
    %v159 = vsel %vm58, %v126, 0.0
    %v160 = vadd.f32 %v158, %v159
    %v161 = vsel %vm58, %v127, 0.0
    %v162 = vadd.f32 %v160, %v161
    %v163 = vsel %vm58, %v128, 0.0
    %v164 = vadd.f32 %v162, %v163
    %v165 = vsel %vm58, %v129, 0.0
    %v166 = vadd.f32 %v164, %v165
    %v167 = vsel %vm58, %v130, 0.0
    %v168 = vadd.f32 %v166, %v167
    %v169 = vsel %vm58, %v131, 0.0
    %v170 = vadd.f32 %v168, %v169
    %v171 = vsel %vm58, %v132, 0.0
    %v172 = vadd.f32 %v170, %v171
    %v173 = vsel %vm58, %v133, 0.0
    %v174 = vadd.f32 %v172, %v173
    %v175 = vsel %vm58, %v134, 0.0
    %v176 = vadd.f32 %v174, %v175
    %v177 = vsel %vm58, %v135, 0.0
    %v178 = vadd.f32 %v176, %v177
    %v179 = vsel %vm58, %v136, 0.0
    %v180 = vadd.f32 %v178, %v179
    %v181 = vsel %vm58, %v137, 0.0
    %v182 = vadd.f32 %v180, %v181
    %v183 = vsel %vm58, %v138, 0.0
    %v184 = vadd.f32 %v182, %v183
    %v185 = vsel %vm58, %v139, 0.0
    %v186 = vadd.f32 %v184, %v185
    %v187 = vrot.slane %v186, 4
    %v188 = vadd.f32 %v186, %v187
    %v189 = vrot.slane %v188, 2
    %v190 = vadd.f32 %v188, %v189
    %v191 = vrot.slane %v190, 1
    %v192 = vadd.f32 %v190, %v191
    %v193 = vadd.f32 %v115, %v192
    %194 = vst.msk [vmem:[#allocation6] sm:$0x1] %vm113, %v193
    // Predicated region
    $region14: #{tpu_custom_call.1} parent=1 // pred_check
      _
    $region15: #{tpu_custom_call.1} parent=1 // pred_check_branch
      %196 = sbr.rel (0) target = $region17
    $region16: #{tpu_custom_call.1} parent=1 // pred_region
      %s198 = ssub.s32 16, 16
      %199 = vsyncadd [#allocation4], %s198
      %s201 = sshll.u32 [#allocation5], 4
      %s202 = int_to_ptr.vmem [resolvable:$true] %s201
      %204 = dma.vmem_to_hbm [thread:$0]  %s202, 16, %s1, [#allocation4]
    $region17: #{tpu_custom_call.1} parent=1 // pred_fallthru
      _
    // Predicated region
    $region18: #{tpu_custom_call.1} parent=1 // pred_check
      _
    $region19: #{tpu_custom_call.1} parent=1 // pred_check_branch
      %206 = sbr.rel (0) target = $region21
    $region20: #{tpu_custom_call.1} parent=1 // pred_region
      %s208 = ssub.s32 16, 16
      %209 = vsyncadd [#allocation7], %s208
      %s211 = sshll.u32 [#allocation6], 4
      %s212 = int_to_ptr.vmem [resolvable:$true] %s211
      %214 = dma.vmem_to_hbm [thread:$0]  %s212, 16, %s2, [#allocation7]
    $region21: #{tpu_custom_call.1} parent=1 // pred_fallthru
      _
    // Predicated region
    $region22: #{tpu_custom_call.1} parent=1 // pred_check
      _
    $region23: #{tpu_custom_call.1} parent=1 // pred_check_branch
      %216 = sbr.rel (0) target = $region25
    $region24: #{tpu_custom_call.1} parent=1 // pred_region
      %217 = dma.done [#allocation4], 16
    $region25: #{tpu_custom_call.1} parent=1 // pred_fallthru
      _
    // Predicated region
    $region26: #{tpu_custom_call.1} parent=1 // pred_check
      _
    $region27: #{tpu_custom_call.1} parent=1 // pred_check_branch
      %219 = sbr.rel (0) target = $region29
    $region28: #{tpu_custom_call.1} parent=1 // pred_region
      %220 = dma.done [#allocation7], 16
    $region29: #{tpu_custom_call.1} parent=1 // pred_fallthru
      _
    %221 = vsyncpa [#allocation3], 1
    %222 = vsyncpa [#allocation4], 1
    %223 = vsyncpa [#allocation7], 1

</llo_original>
